<compile_context>
chip_gen: v7x
topology: tpu7x:2x2x1
jax: 0.10.0
libtpu: 0.0.40
codegen_flags: <defaults>
</compile_context>

<pallas_src>
import jax
import jax.numpy as jnp
from jax.experimental import pallas as pl
from jax.experimental.pallas import tpu as pltpu

_TB_MAX = 1024  # rows per grid step; 512-1024-row tiles sit near HBM roofline


def trimmer_mask_kernel(mask_ref, mask_out_ref, maxlen_ref):
    """One grid step handles a (TB, P) slab of the (batch, particles) mask.

    mask_ref     : (TB, P) input mask, native numeric dtype
    mask_out_ref : (TB, P) int8   -- 1 where mask != 0 (i.e. mask.bool())
    maxlen_ref   : (1, 1)  int32  -- running max of per-row valid lengths,
                                     resident across the whole grid.
    """
    @pl.when(pl.program_id(0) == 0)
    def _init():
        maxlen_ref[...] = jnp.zeros_like(maxlen_ref)

    valid = mask_ref[...] != 0                               # bool vregs
    mask_out_ref[...] = valid.astype(jnp.int8)               # 1 B/elem writeback
    # Per-row valid length (lane reduce), then per-tile max (sublane reduce).
    row_len = jnp.sum(valid.astype(jnp.float32), axis=-1, keepdims=True)  # (TB,1)
    tile_max = jnp.max(row_len, axis=0, keepdims=True).astype(jnp.int32)  # (1,1)
    maxlen_ref[...] = jnp.maximum(maxlen_ref[...], tile_max)


def mask_stats(mask_2d):
    """Fused boolify + max-valid-length over a (N, P) mask.

    Returns (mask_i8 of shape (N, P), maxlen of shape (1, 1) int32).
    """
    N, P = mask_2d.shape

    if N <= _TB_MAX:
        # One full-array block: block_shape == array dims always satisfies the
        # (8,128) tiling rule, and at these sizes splitting the grid is pure
        # per-step pipeline overhead (nothing worth sharding, even on v7x).
        TB, G = N, 1
        padded = mask_2d
    else:
        # Big batches: 1024-row tiles (multiple of 32 so the packed int8
        # output stays on dense sublane stores). Zero-padded rows have
        # length 0, so they never affect the max and are sliced off below.
        TB = _TB_MAX
        G = pl.cdiv(N, TB)
        pad_rows = G * TB - N
        padded = jnp.pad(mask_2d, ((0, pad_rows), (0, 0))) if pad_rows else mask_2d
    Np = G * TB

    mask_i8, maxlen = pl.pallas_call(
        trimmer_mask_kernel,
        out_shape=(
            jax.ShapeDtypeStruct((Np, P), jnp.int8),
            jax.ShapeDtypeStruct((1, 1), jnp.int32),
        ),
        grid=(G,),
        in_specs=[pl.BlockSpec((TB, P), lambda b: (b, 0))],
        out_specs=(
            pl.BlockSpec((TB, P), lambda b: (b, 0)),
            # Resident (1,1) accumulator block -> grid axis is "arbitrary".
            pl.BlockSpec((1, 1), lambda b: (0, 0)),
        ),
        compiler_params=pltpu.CompilerParams(
            dimension_semantics=("arbitrary",)),
    )(padded)

    if Np != N:
        mask_i8 = mask_i8[:N]
    return mask_i8, maxlen


class SequenceTrimmer:
    """JAX/Pallas mirror of the PyTorch SequenceTrimmer module.

    lane_multiple: the eval-time trim length is rounded UP to this multiple
    (default 128 keeps every downstream kernel's last dim lane-dense and caps
    recompiles; the extra columns carry mask=False so results are equivalent
    under masking). Set lane_multiple=1 for the exact PyTorch slice length.
    """

    def __init__(self, enabled=False, target=(0.9, 1.02), lane_multiple=128):
        self.enabled = enabled
        self.target = target
        self.lane_multiple = max(int(lane_multiple), 1)
        self._counter = 0
        self.training = False  # eval-mode by default (matches inference use)

    def __call__(self, x, v=None, mask=None, uu=None):
        N, _, P = x.shape

        if mask is None:
            # torch.ones_like(x[:, :1]).bool(): all-valid -> maxlen == P,
            # so the trimming branch can never shrink anything; skip the kernel.
            mask_b = jnp.ones((N, 1, P), jnp.bool_)
            maxlen_dev = None
        else:
            mask_2d = jnp.asarray(mask).reshape(N, P)       # metadata-only reshape
            if mask_2d.dtype == jnp.bool_:
                mask_2d = mask_2d.astype(jnp.int8)          # feed kernel an int8 ref
            mask_i8, maxlen_dev = mask_stats(mask_2d)
            # int8 -> bool is a cheap 1 B/elem pass (bool refs in-kernel are not
            # portable across Mosaic versions, so keep the view-cast here).
            mask_b = mask_i8.reshape(N, 1, P).astype(jnp.bool_)

        if self.enabled:
            if self._counter < 5:
                self._counter += 1
            else:
                if self.training:
                    # TODO(synk): training-mode stochastic trimming (quantile of
                    # lengths + rand/argsort/gather permutation) needs per-row
                    # sorts and data-dependent shapes; no clean Pallas equivalent.
                    maxlen = P
                else:
                    # eval: maxlen = mask.sum(-1).max(), computed in-kernel; the
                    # int() below is the single unavoidable 4-byte host sync.
                    maxlen = P if maxlen_dev is None else int(maxlen_dev[0, 0])
                maxlen = max(maxlen, 1)
                # Round up so downstream kernels keep a lane-dense last dim.
                m = self.lane_multiple
                maxlen = min(P, ((maxlen + m - 1) // m) * m)
                if maxlen < P:
                    # Dynamic-length trim: host-driven static slice (dynamic
                    # output shapes cannot live inside jit / Pallas).
                    mask_b = mask_b[:, :, :maxlen]
                    x = x[:, :, :maxlen]
                    if v is not None:
                        v = v[:, :, :maxlen]
                    if uu is not None:
                        uu = uu[:, :, :maxlen, :maxlen]

        return x, v, mask_b, uu


if __name__ == "__main__":
    key = jax.random.PRNGKey(0)
    kx, kv, ku = jax.random.split(key, 3)

    # (batch, features, particles); P a multiple of 128 keeps lanes dense.
    N, C, P = 2, 4, 256
    x = jax.random.normal(kx, (N, C, P), jnp.float32)
    v = jax.random.normal(kv, (N, 4, P), jnp.float32)
    uu = jax.random.normal(ku, (N, 1, P, P), jnp.float32)

    # Valid lengths 100 and 72 -> maxlen = 100 (rounds up to 128 < 256).
    valid_len = jnp.array([100, 72], jnp.int32)
    mask = (jnp.arange(P)[None, None, :] < valid_len[:, None, None]).astype(jnp.float32)

    # 0) Kernel sanity: fused boolify + max-valid-length.
    mask_i8_chk, maxlen_chk = mask_stats(mask.reshape(N, P))
    jax.block_until_ready((mask_i8_chk, maxlen_chk))
    assert int(maxlen_chk[0, 0]) == 100
    assert bool(jnp.array_equal(mask_i8_chk != 0, mask.reshape(N, P) != 0))

    # 1) Default path (enabled=False): pass-through + mask boolification.
    trimmer = SequenceTrimmer(enabled=False)
    x1, v1, m1, uu1 = trimmer(x, v=v, mask=mask, uu=uu)
    jax.block_until_ready((x1, v1, m1, uu1))
    assert x1.shape == (N, C, P) and v1.shape == v.shape and uu1.shape == uu.shape
    assert m1.shape == (N, 1, P) and m1.dtype == jnp.bool_
    assert bool(jnp.array_equal(m1, mask != 0))
    assert bool(jnp.array_equal(x1, x))

    # 2) mask=None path: defaults to an all-ones (all-valid) mask.
    _, _, m_ones, _ = trimmer(x, mask=None)
    jax.block_until_ready(m_ones)
    assert m_ones.shape == (N, 1, P) and m_ones.dtype == jnp.bool_
    assert bool(jnp.all(m_ones))

    # 3) enabled + eval trimming, default lane_multiple=128: maxlen 100 -> 128.
    trimmer2 = SequenceTrimmer(enabled=True)
    trimmer2._counter = 5
    x2, v2, m2, uu2 = trimmer2(x, v=v, mask=mask, uu=uu)
    jax.block_until_ready((x2, v2, m2, uu2))
    assert x2.shape == (N, C, 128) and v2.shape == (N, 4, 128)
    assert m2.shape == (N, 1, 128) and uu2.shape == (N, 1, 128, 128)
    assert bool(jnp.array_equal(x2, x[:, :, :128]))
    assert bool(jnp.array_equal(m2, mask[:, :, :128] != 0))

    # 4) enabled + eval, lane_multiple=1: exact PyTorch slice (maxlen = 100).
    trimmer3 = SequenceTrimmer(enabled=True, lane_multiple=1)
    trimmer3._counter = 5
    x3, v3, m3, uu3 = trimmer3(x, v=v, mask=mask, uu=uu)
    jax.block_until_ready((x3, v3, m3, uu3))
    assert x3.shape == (N, C, 100) and v3.shape == (N, 4, 100)
    assert m3.shape == (N, 1, 100) and uu3.shape == (N, 1, 100, 100)
    assert bool(jnp.array_equal(x3, x[:, :, :100]))

    print("KERNEL_OK")
</pallas_src>

<mosaic_0001>
module attributes {stable_mosaic.version = 11 : i64} {
  func.func @trimmer_mask_kernel(%arg0: i32, %arg1: memref<2x256xf32, #tpu.memory_space<vmem>>, %arg2: memref<2x256xi8, #tpu.memory_space<vmem>>, %arg3: memref<1x1xi32, #tpu.memory_space<vmem>>) attributes {dimension_semantics = [#tpu.dimension_semantics<arbitrary>], iteration_bounds = array<i64: 1>, scalar_prefetch = 0 : i64, scratch_operands = 0 : i64, tpu.core_type = #tpu.core_type<tc>, window_params = [{transform_indices = @transform_0, window_bounds = array<i64: 2, 256>}, {transform_indices = @transform_1, window_bounds = array<i64: 2, 256>}, {pipeline_mode = #tpu.pipeline_mode<synchronous>, transform_indices = @transform_2, window_bounds = array<i64: 1, 1>}]} {
    %c0_i32 = arith.constant 0 : i32
    %0 = arith.cmpi eq, %arg0, %c0_i32 : i32
    %1 = arith.extui %0 : i1 to i32
    %c0_i32_0 = arith.constant 0 : i32
    %2 = arith.cmpi ne, %1, %c0_i32_0 : i32
    scf.if %2 {
      %c0_i32_10 = arith.constant 0 : i32
      %18 = vector.broadcast %c0_i32_10 : i32 to vector<1x1xi32>
      %c0_11 = arith.constant 0 : index
      %c0_12 = arith.constant 0 : index
      %19 = vector.load %arg3[%c0_11, %c0_12] : memref<1x1xi32, #tpu.memory_space<vmem>>, vector<1x1xi32>
      tpu.vector_store %arg3[%c0_11, %c0_12], %18 {strides = array<i32>} : memref<1x1xi32, #tpu.memory_space<vmem>>, vector<1x1xi32>,
    } else {
    }
    %c0 = arith.constant 0 : index
    %c0_1 = arith.constant 0 : index
    %3 = vector.load %arg1[%c0, %c0_1] : memref<2x256xf32, #tpu.memory_space<vmem>>, vector<2x256xf32>
    %cst = arith.constant 0.000000e+00 : f32
    %4 = vector.broadcast %cst : f32 to vector<2x256xf32>
    %5 = arith.cmpf one, %3, %4 : vector<2x256xf32>
    %6 = arith.extui %5 : vector<2x256xi1> to vector<2x256xi8>
    %c0_2 = arith.constant 0 : index
    %c0_3 = arith.constant 0 : index
    %7 = vector.load %arg2[%c0_2, %c0_3] : memref<2x256xi8, #tpu.memory_space<vmem>>, vector<2x256xi8>
    tpu.vector_store %arg2[%c0_2, %c0_3], %6 {strides = array<i32>} : memref<2x256xi8, #tpu.memory_space<vmem>>, vector<2x256xi8>,
    %8 = arith.extui %5 : vector<2x256xi1> to vector<2x256xi32>
    %9 = arith.sitofp %8 : vector<2x256xi32> to vector<2x256xf32>
    %cst_4 = arith.constant dense<0.000000e+00> : vector<2xf32>
    %10 = vector.multi_reduction <add>, %9, %cst_4 [1] : vector<2x256xf32> to vector<2xf32>
    %11 = vector.shape_cast %10 : vector<2xf32> to vector<2x1xf32>
    %cst_5 = arith.constant dense<0xFF800000> : vector<1xf32>
    %12 = vector.multi_reduction <maximumf>, %11, %cst_5 [0] : vector<2x1xf32> to vector<1xf32>
    %13 = vector.shape_cast %12 : vector<1xf32> to vector<1x1xf32>
    %14 = arith.fptosi %13 : vector<1x1xf32> to vector<1x1xi32>
    %c0_6 = arith.constant 0 : index
    %c0_7 = arith.constant 0 : index
    %15 = vector.load %arg3[%c0_6, %c0_7] : memref<1x1xi32, #tpu.memory_space<vmem>>, vector<1x1xi32>
    %16 = arith.maxsi %15, %14 : vector<1x1xi32>
    %c0_8 = arith.constant 0 : index
    %c0_9 = arith.constant 0 : index
    %17 = vector.load %arg3[%c0_8, %c0_9] : memref<1x1xi32, #tpu.memory_space<vmem>>, vector<1x1xi32>
    tpu.vector_store %arg3[%c0_8, %c0_9], %16 {strides = array<i32>} : memref<1x1xi32, #tpu.memory_space<vmem>>, vector<1x1xi32>,
    return
  }
  func.func @transform_0(%arg0: i32) -> (i32, i32) {
    %c0_i32 = arith.constant 0 : i32
    %c0_i32_0 = arith.constant 0 : i32
    return %arg0, %c0_i32 : i32, i32
  }
  func.func @transform_1(%arg0: i32) -> (i32, i32) {
    %c0_i32 = arith.constant 0 : i32
    %c0_i32_0 = arith.constant 0 : i32
    return %arg0, %c0_i32 : i32, i32
  }
  func.func @transform_2(%arg0: i32) -> (i32, i32) {
    %c0_i32 = arith.constant 0 : i32
    %c0_i32_0 = arith.constant 0 : i32
    %c0_i32_1 = arith.constant 0 : i32
    return %c0_i32, %c0_i32_0 : i32, i32
  }
}

</mosaic_0001>

<llo_original>
// kernel: tpu_custom_call.1
$region0: #{tpu_custom_call.1}
  #allocation0 [shape = 'u32[]', space=smem, size = 0x4, offset = 0x4, fixed_abs, tag = 'smem constant byte address 0x4 - core index']
  #allocation1 [shape = 'u32[144,128]{1,0:T(1,128)}', space=vmem, size = 0x12000, scoped, tag = 'internal scratch']
  %s0 = inlined_call_operand.hbm [shape: f32[2,256], index: 0, kind: input, shape index: {}]
  %s1 = inlined_call_operand.hbm [shape: s8[2,256], index: 1, kind: output, shape index: {0}]
  %s2 = inlined_call_operand.hbm [shape: s32[1,1], index: 2, kind: output, shape index: {1}]
  %3 = xla_tuple %s1, %s2
  %s4 = sld [smem:[#allocation0]]
  $region30: #{tpu_custom_call.1} parent=0
    _
  %s6 = ssub.s32 1, %s4
  %s7 = scalar_select 0, %s6, %s4
  $region1: #{tpu_custom_call.1} parent=0
    #allocation2 [shape = 'u8[2048]{0}', space=vmem, size = 0x800, scoped, tag = 'input window, operand 0, single buffered']
    #allocation3 [shape = 's32[1]{0}', space=sflag, size = 0x4, scoped, tag = 'scoped memory for tpu_custom_call.1']
    #allocation4 [shape = 's32[1]{0}', space=sflag, size = 0x4, scoped, tag = 'scoped memory for tpu_custom_call.1']
    #allocation5 [shape = 'u8[1024]{0}', space=vmem, size = 0x400, scoped, tag = 'output window, operand 0, single buffered']
    #allocation6 [shape = 'u8[512]{0}', space=vmem, size = 0x400, scoped, tag = 'output window, operand 1, single buffered']
    #allocation7 [shape = 's32[1]{0}', space=sflag, size = 0x4, scoped, tag = 'scoped memory for tpu_custom_call.1']
    %8 = vsyncpa [#allocation3], 0
    %9 = vsyncpa [#allocation4], 0
    %10 = vsyncpa [#allocation7], 0
    // Predicated region
    $region2: #{tpu_custom_call.1} parent=1 // pred_check
      _
    $region3: #{tpu_custom_call.1} parent=1 // pred_check_branch
      %12 = sbr.rel (0) target = $region5
    $region4: #{tpu_custom_call.1} parent=1 // pred_region
      %s14 = ssub.s32 64, 64
      %15 = vsyncadd [#allocation3], %s14
      %s17 = sshll.u32 [#allocation2], 4
      %s18 = int_to_ptr.vmem [resolvable:$true] %s17
      %20 = dma.hbm_to_vmem [thread:$0]  %s0, 64, %s18, [#allocation3]
    $region5: #{tpu_custom_call.1} parent=1 // pred_fallthru
      _
    // Predicated region
    $region6: #{tpu_custom_call.1} parent=1 // pred_check
      _
    $region7: #{tpu_custom_call.1} parent=1 // pred_check_branch
      %22 = sbr.rel (0) target = $region9
    $region8: #{tpu_custom_call.1} parent=1 // pred_region
      %23 = dma.done [#allocation3], 64
    $region9: #{tpu_custom_call.1} parent=1 // pred_fallthru
      _
    %p26 = scmp.eq.s32.totalorder 0, 0
    // Predicated region
    $region10: #{tpu_custom_call.1} parent=1 // pred_check
      %p27 = pneg %p26
    $region11: #{tpu_custom_call.1} parent=1 // pred_check_branch
      %29 = sbr.rel (%p27) target = $region13
    $region12: #{tpu_custom_call.1} parent=1 // pred_region
      %vm30 = vcmask 0
      %31 = vst.msk [vmem:[#allocation6] sm:$0x1] %vm30, 0
    $region13: #{tpu_custom_call.1} parent=1 // pred_fallthru
      _
    %v32 = vld [vmem:[#allocation2] sm:$0xf]
    %vm33 = vcmp.ne.f32.partialorder %v32, 0.0
    %v34 = vsel %vm33, 1, 0
    %v36 = vunpack.c.l.s4 1983009808
    %v37 = vunpack.c.0.s8 %v36
    %v38 = vlaneseq
    %v39 = vshrl.u32 %v38, 7
    %v40 = vsub.s32 %v37, %v39
    %v41 = vrot.slane %v34, %v40
    %vm42 = vcmp.ne.s32.totalorder %v41, 0
    %v43 = vsel %vm42, 1, 0
    %v44 = vpack.c.b16 %v43, %v43
    %v45 = vpack.c.b8 %v44, %v44
    %vm46 = vnez %v45
    %v47 = vsel %vm46, 16843009, 0
    %v49 = vunpack.c.l.s4 1966171168
    %v50 = vunpack.c.0.s8 %v49
    %v51 = vlaneseq
    %v52 = vshrl.u32 %v51, 7
    %v53 = vsub.s32 %v50, %v52
    %v54 = vrot.slane %v47, %v53
    %v55 = vcombine.high %v54, %v54
    %v57 = vunpack.c.l.s4 1966171168
    %v58 = vunpack.c.0.s8 %v57
    %v59 = vlaneseq
    %v60 = vshrl.u32 %v59, 7
    %v61 = vsub.s32 %v58, %v60
    %v62 = vrot.slane %v54, %v61
    %v64 = vunpack.c.l.s4 1966171168
    %v65 = vunpack.c.0.s8 %v64
    %v66 = vlaneseq
    %v67 = vshrl.u32 %v66, 7
    %v68 = vsub.s32 %v65, %v67
    %v69 = vrot.slane %v55, %v68
    %vm70 = vnez %v62
    %vm71 = vnez %v69
    %v72 = vsel %vm70, 16843009, 0
    %v73 = vsel %vm71, 16843009, 0
    %v74 = vcombine.low %v72, %v73
    %v76 = vunpack.c.l.s4 1966171168
    %v77 = vunpack.c.0.s8 %v76
    %v78 = vlaneseq
    %v79 = vshrl.u32 %v78, 7
    %v80 = vsub.s32 %v77, %v79
    %v81 = vrot.slane %v74, %v80
    %v83 = vunpack.c.l.s4 1966171168
    %v84 = vunpack.c.0.s8 %v83
    %v85 = vlaneseq
    %v86 = vshrl.u32 %v85, 7
    %v87 = vsub.s32 %v84, %v86
    %v88 = vrot.slane %v81, %v87
    %vm89 = vcmask 1040384
    %vm90 = vsmask.f32 256
    %vm91 = vmand %vm89, %vm90
    %vm92 = vcmask 1041409
    %vm93 = vsmask.f32 1280
    %vm94 = vmand %vm92, %vm93
    %vm95 = vmor %vm94, %vm91
    %v96 = vld [vmem:[#allocation5] sm:$0x3]
    %v97 = vsel %vm95, %v88, %v96
    %98 = vst [vmem:[#allocation5] sm:$0x3] %v97
    %v99 = vcvt.s32.f32 %v34
    %v102 = vunpack.c.l.s4 1983009808
    %v103 = vunpack.c.0.s8 %v102
    %v104 = vlaneseq
    %v105 = vshrl.u32 %v104, 7
    %v106 = vsub.s32 %v103, %v105
    %v107 = vrot.slane %v99, %v106
    %v108 = vcombine.high %v107, %v107
    %vm111 = vcmask 1041408
    %v112 = vsel %vm111, %v107, 0.0
    %v113 = vsel %vm111, %v108, 0.0
    %v114 = vadd.f32 %v112, %v113
    %115 = vadd.xlane.f32.xlu0 %v114
    %v116 = vpop.xlane.xlu0 %115
    %v117 = vsel %vm111, %v116, -inf
    %v118 = vrot.slane %v117, 4
    %v119 = vmax.f32 %v117, %v118
    %v120 = vrot.slane %v119, 2
    %v121 = vmax.f32 %v119, %v120
    %v122 = vrot.slane %v121, 1
    %v123 = vmax.f32 %v121, %v122
    %v124 = vcvt.f32.s32.to.zero.pseudo %v123
    %v125 = vld [vmem:[#allocation6] sm:$0x1]
    %vm126 = vcmp.gt.s32.totalorder %v125, %v124
    %v127 = vsel %vm126, %v125, %v124
    %vm128 = vcmask 0
    %129 = vst.msk [vmem:[#allocation6] sm:$0x1] %vm128, %v127
    // Predicated region
    $region14: #{tpu_custom_call.1} parent=1 // pred_check
      _
    $region15: #{tpu_custom_call.1} parent=1 // pred_check_branch
      %131 = sbr.rel (0) target = $region17
    $region16: #{tpu_custom_call.1} parent=1 // pred_region
      %s133 = ssub.s32 32, 32
      %134 = vsyncadd [#allocation4], %s133
      %s136 = sshll.u32 [#allocation5], 4
      %s137 = int_to_ptr.vmem [resolvable:$true] %s136
      %139 = dma.vmem_to_hbm [thread:$0]  %s137, 32, %s1, [#allocation4]
    $region17: #{tpu_custom_call.1} parent=1 // pred_fallthru
      _
    // Predicated region
    $region18: #{tpu_custom_call.1} parent=1 // pred_check
      _
    $region19: #{tpu_custom_call.1} parent=1 // pred_check_branch
      %141 = sbr.rel (0) target = $region21
    $region20: #{tpu_custom_call.1} parent=1 // pred_region
      %s143 = ssub.s32 16, 16
      %144 = vsyncadd [#allocation7], %s143
      %s146 = sshll.u32 [#allocation6], 4
      %s147 = int_to_ptr.vmem [resolvable:$true] %s146
      %149 = dma.vmem_to_hbm [thread:$0]  %s147, 16, %s2, [#allocation7]
    $region21: #{tpu_custom_call.1} parent=1 // pred_fallthru
      _
    // Predicated region
    $region22: #{tpu_custom_call.1} parent=1 // pred_check
      _
    $region23: #{tpu_custom_call.1} parent=1 // pred_check_branch
      %151 = sbr.rel (0) target = $region25
    $region24: #{tpu_custom_call.1} parent=1 // pred_region
      %152 = dma.done [#allocation4], 32
    $region25: #{tpu_custom_call.1} parent=1 // pred_fallthru
      _
    // Predicated region
    $region26: #{tpu_custom_call.1} parent=1 // pred_check
      _
    $region27: #{tpu_custom_call.1} parent=1 // pred_check_branch
      %154 = sbr.rel (0) target = $region29
    $region28: #{tpu_custom_call.1} parent=1 // pred_region
      %155 = dma.done [#allocation7], 16
    $region29: #{tpu_custom_call.1} parent=1 // pred_fallthru
      _
    %156 = vsyncpa [#allocation3], 1
    %157 = vsyncpa [#allocation4], 1
    %158 = vsyncpa [#allocation7], 1

</llo_original>
